<compile_context>
chip_gen: v5e
topology: v5e:2x2
jax: 0.10.0
libtpu: 0.0.40
codegen_flags: <defaults>
</compile_context>

<pallas_src>
import jax
import jax.numpy as jnp
from jax.experimental import pallas as pl
from jax.experimental.pallas import tpu as pltpu


def _kalman_kernel(mu_ref, w_ref, bd_ref, aleft_ref, qd_ref, mu_out_ref, w_out_ref):
    """One grid step over TB batches, column-blocked on the lane axis.

    mu_ref    : (F, TB*N)        column block b holds mu_b^T
    w_ref     : (N, TB*N)        column block b holds W_b
    bd_ref    : (3, TB*N, TB*N)  block-diagonal constants:
                  [0] kron(I_TB, I_N + dt*(1-lam)*A^T)   mean drift (identity folded in)
                  [1] kron(I_TB, dt*lam/dx * stencil)    LWR finite-difference term
                  [2] kron(I_TB, dt*A^T)                 covariance right term
    aleft_ref : (N, N)           I_N + dt*A              covariance left term (identity folded in)
    qd_ref    : (N, TB*N)        dt*Q_scale*B diag(C) B^T tiled across the TB batches
    """
    Ff, _bn = mu_ref.shape

    mu = mu_ref[...].astype(jnp.float32)          # (F, bn)
    W = w_ref[...].astype(jnp.float32)            # (N, bn)

    # ---- mean path: 2 lane-dense matmuls for the whole batch block ----
    lin = jnp.dot(mu, bd_ref[0], preferred_element_type=jnp.float32)     # mu + dt*(1-lam)*A@mu
    flux = mu[0:1, :] * mu[1:2, :]                                       # f = rho * u, (1, bn)
    pde = jnp.dot(flux, bd_ref[1], preferred_element_type=jnp.float32)   # dt*lam*drho_dt, (1, bn)
    feat0 = jax.lax.broadcasted_iota(jnp.int32, (Ff, 1), 0) == 0         # only feature 0 gets PDE
    mu_out_ref[...] = (lin + jnp.where(feat0, pde, 0.0)).astype(mu_out_ref.dtype)

    # ---- covariance path: 2 lane-dense matmuls, identity folded into Aleft ----
    left = jnp.dot(aleft_ref[...], W, preferred_element_type=jnp.float32)   # (I + dt*A) @ W
    right = jnp.dot(W, bd_ref[2], preferred_element_type=jnp.float32)       # W @ (dt*A^T)
    w_out_ref[...] = (left + right + qd_ref[...]).astype(w_out_ref.dtype)


def _plan_tiling(B, N, F, itemsize):
    """Pick TB (batches per grid step) and a VMEM limit, generation-aware."""
    try:
        cap = int(pltpu.get_tpu_info().vmem_capacity_bytes)   # 64 MiB v7x, 128 MiB v5e/v6e
    except Exception:  # pragma: no cover - conservative fallback (v7x-sized)
        cap = 64 << 20
    limit = min(int(cap * 0.6), 100 << 20)

    def footprint(tb):
        bn = tb * N
        blocks = 2 * 2 * (F + N) * bn * itemsize          # mu/W in + out, double-buffered
        consts = 2 * (3 * bn * bn + N * N + N * bn) * 4   # block-diags + Aleft + Qd, double-buffered
        return blocks + consts

    # Legal TB: divides B, and the lane dim TB*N is either the full extent
    # (single grid step) or a multiple of 128 (unmasked, layout-legal blocks).
    legal = [tb for tb in range(1, B + 1)
             if B % tb == 0 and (tb == B or (tb * N) % 128 == 0)]
    # Cap TB*N to bound the quadratic block-diagonal constants.
    capped = [tb for tb in legal if tb * N <= 512] or [min(legal)]
    fitting = [tb for tb in capped if footprint(tb) <= int(limit * 0.9)]
    tb = max(fitting) if fitting else min(capped)
    limit = max(limit, min(int(footprint(tb) * 1.25) + (1 << 20), int(cap * 0.9)))
    return tb, limit


def kalman_refinement_forward(mu_t, W_t, dt, params):
    """Pallas forward. mu_t: [B, N, F], W_t: [B, N, N], dt: scalar."""
    if mu_t.ndim != 3 or W_t.ndim != 3:
        raise ValueError("mu_t must be (B, N, F) and W_t must be (B, N, N)")
    B, N, F = mu_t.shape
    if F < 2:
        raise ValueError("Expected at least 2 features (density, velocity)")
    # Mirror the module's auto-fix for [B, F, N] inputs.
    if N < F and W_t.shape[1] == F:
        mu_t = jnp.transpose(mu_t, (0, 2, 1))
        N, F = F, N
    if W_t.shape[1] != N or W_t.shape[2] != N:
        raise ValueError("Mismatch between mu_t and W_t dimensions")
    if N < 2:
        raise ValueError("LWR stencil requires at least 2 nodes (N >= 2)")

    hp = jax.lax.Precision.HIGHEST
    A = params["A"].astype(jnp.float32)
    Bm = params["B"].astype(jnp.float32)
    C = params["C"].astype(jnp.float32)
    dtf = jnp.asarray(dt, jnp.float32)
    lam = jnp.asarray(params["lam"], jnp.float32)
    q = jnp.asarray(params["Q_scale"], jnp.float32)
    dx = jnp.asarray(params["dx"], jnp.float32)

    # --- batch-invariant precomputation (hoisted out of the kernel) ---
    eyeN = jnp.eye(N, dtype=jnp.float32)
    A_T = A.T
    Gp = eyeN + (dtf * (1.0 - lam)) * A_T                  # identity folded into mean drift
    Aleft = eyeN + dtf * A                                  # identity folded into covariance left
    AdT = dtf * A_T
    Qd = dtf * q * jnp.dot(Bm * C[None, :], Bm.T, precision=hp)

    # LWR stencil folded into a matrix: (f @ Dm_s)[i] = dt*lam*drho_dt[i]
    #   i < N-1: -dt*lam*(f[i+1]-f[i])/dx ;  i = N-1: replicate last difference.
    idx = jnp.arange(N - 1)
    Dm = jnp.zeros((N, N), jnp.float32)
    Dm = Dm.at[idx, idx].set(1.0)
    Dm = Dm.at[idx + 1, idx].set(-1.0)
    Dm = Dm.at[N - 2, N - 1].set(1.0)
    Dm = Dm.at[N - 1, N - 1].set(-1.0)
    Dm_s = (dtf * lam / dx) * Dm

    TB, vmem_limit = _plan_tiling(B, N, F, jnp.dtype(mu_t.dtype).itemsize)
    bn = TB * N
    grid = (B // TB,)

    # Block-diagonal right-hand matrices for batch-fused matmuls, stacked into one input.
    eyeTB = jnp.eye(TB, dtype=jnp.float32)
    BD = jnp.stack([jnp.kron(eyeTB, Gp),
                    jnp.kron(eyeTB, Dm_s),
                    jnp.kron(eyeTB, AdT)])                  # (3, bn, bn)
    QdTile = jnp.tile(Qd, (1, TB))                          # (N, bn)

    # Lane-dense layouts: batch*N on the lane axis (layout plumbing only).
    mu2 = jnp.transpose(mu_t, (2, 0, 1)).reshape(F, B * N)  # (F, B*N), col block b = mu_b^T
    W2 = jnp.transpose(W_t, (1, 0, 2)).reshape(N, B * N)    # (N, B*N), col block b = W_b
    # TODO(synk): if this layer runs in a model loop, carry (F,B*N)/(N,B*N) layouts
    # across calls instead of transposing in/out every invocation.

    mu_spec = pl.BlockSpec((F, bn), lambda g: (0, g))
    w_spec = pl.BlockSpec((N, bn), lambda g: (0, g))
    bd_spec = pl.BlockSpec((3, bn, bn), lambda g: (0, 0, 0))
    aleft_spec = pl.BlockSpec((N, N), lambda g: (0, 0))
    qd_spec = pl.BlockSpec((N, bn), lambda g: (0, 0))

    mu2_next, W2_next = pl.pallas_call(
        _kalman_kernel,
        out_shape=(jax.ShapeDtypeStruct((F, B * N), mu_t.dtype),
                   jax.ShapeDtypeStruct((N, B * N), W_t.dtype)),
        grid=grid,
        in_specs=[mu_spec, w_spec, bd_spec, aleft_spec, qd_spec],
        out_specs=(mu_spec, w_spec),
        compiler_params=pltpu.CompilerParams(
            dimension_semantics=("parallel",),
            vmem_limit_bytes=vmem_limit),
    )(mu2, W2, BD, Aleft, QdTile)

    mu_next = jnp.transpose(mu2_next.reshape(F, B, N), (1, 2, 0))   # (B, N, F)
    W_next = jnp.transpose(W2_next.reshape(N, B, N), (1, 0, 2))     # (B, N, N)
    return mu_next, W_next


def reference_forward(mu_t, W_t, dt, params):
    """Pure-JAX reference mirroring the PyTorch module."""
    A = params["A"]; Bm = params["B"]; C = params["C"]
    lam = params["lam"]; q = params["Q_scale"]; dx = params["dx"]
    hp = jax.lax.Precision.HIGHEST

    rho = mu_t[:, :, 0]
    u = mu_t[:, :, 1]
    f = rho * u
    df = (f[:, 1:] - f[:, :-1]) / dx
    df = jnp.concatenate([df, df[:, -1:]], axis=1)            # replicate pad
    pde = jnp.stack([-df, jnp.zeros_like(u)], axis=-1)        # [B, N, 2]

    linear = jnp.einsum('ij,bjf->bif', A, mu_t, precision=hp)
    total = (1.0 - lam) * linear
    total = total.at[:, :, :2].add(lam * pde)
    mu_next = mu_t + dt * total

    pn = jnp.dot(Bm * C[None, :], Bm.T, precision=hp)          # B @ diag(C) @ B^T
    dW = (jnp.einsum('ij,bjk->bik', A, W_t, precision=hp)
          + jnp.einsum('bij,kj->bik', W_t, A, precision=hp)
          + q * pn[None, :, :])
    W_next = W_t + dt * dW
    return mu_next, W_next


if __name__ == "__main__":
    Bsz, N, F = 2, 16, 4
    key = jax.random.PRNGKey(0)
    k1, k2 = jax.random.split(key)

    mu_t = jax.random.normal(k1, (Bsz, N, F), dtype=jnp.float32)
    W_raw = jax.random.normal(k2, (Bsz, N, N), dtype=jnp.float32)
    W_t = 0.5 * (W_raw + jnp.swapaxes(W_raw, 1, 2))   # symmetric covariance-like
    dt = 0.1

    # Deterministic parameter init, matching nn.Module.__init__:
    #   A = I, B = I, C = ones, Q_scale = 0.01, lam = 0.5, dx = 50.0
    params = {
        "A": jnp.eye(N, dtype=jnp.float32),
        "B": jnp.eye(N, dtype=jnp.float32),
        "C": jnp.ones((N,), dtype=jnp.float32),
        "Q_scale": 0.01,
        "lam": 0.5,
        "dx": 50.0,
    }

    mu_next, w_next = kalman_refinement_forward(mu_t, W_t, dt, params)
    jax.block_until_ready((mu_next, w_next))

    mu_ref, w_ref = reference_forward(mu_t, W_t, dt, params)
    assert jnp.allclose(mu_next, mu_ref, rtol=1e-3, atol=1e-3), "mu mismatch"
    assert jnp.allclose(w_next, w_ref, rtol=1e-3, atol=1e-3), "W mismatch"

    print("KERNEL_OK")
</pallas_src>

<mosaic_0001>
module attributes {stable_mosaic.version = 11 : i64} {
  func.func @_kalman_kernel(%arg0: i32, %arg1: memref<4x32xf32, #tpu.memory_space<vmem>>, %arg2: memref<16x32xf32, #tpu.memory_space<vmem>>, %arg3: memref<3x32x32xf32, #tpu.memory_space<vmem>>, %arg4: memref<16x16xf32, #tpu.memory_space<vmem>>, %arg5: memref<16x32xf32, #tpu.memory_space<vmem>>, %arg6: memref<4x32xf32, #tpu.memory_space<vmem>>, %arg7: memref<16x32xf32, #tpu.memory_space<vmem>>) attributes {dimension_semantics = [#tpu.dimension_semantics<parallel>], iteration_bounds = array<i64: 1>, scalar_prefetch = 0 : i64, scratch_operands = 0 : i64, tpu.core_type = #tpu.core_type<tc>, window_params = [{transform_indices = @transform_0, window_bounds = array<i64: 4, 32>}, {transform_indices = @transform_1, window_bounds = array<i64: 16, 32>}, {pipeline_mode = #tpu.pipeline_mode<synchronous>, transform_indices = @transform_2, window_bounds = array<i64: 3, 32, 32>}, {pipeline_mode = #tpu.pipeline_mode<synchronous>, transform_indices = @transform_3, window_bounds = array<i64: 16, 16>}, {pipeline_mode = #tpu.pipeline_mode<synchronous>, transform_indices = @transform_4, window_bounds = array<i64: 16, 32>}, {transform_indices = @transform_5, window_bounds = array<i64: 4, 32>}, {transform_indices = @transform_6, window_bounds = array<i64: 16, 32>}]} {
    %c0 = arith.constant 0 : index
    %c0_0 = arith.constant 0 : index
    %0 = vector.load %arg1[%c0, %c0_0] : memref<4x32xf32, #tpu.memory_space<vmem>>, vector<4x32xf32>
    %c0_1 = arith.constant 0 : index
    %c0_2 = arith.constant 0 : index
    %1 = vector.load %arg2[%c0_1, %c0_2] : memref<16x32xf32, #tpu.memory_space<vmem>>, vector<16x32xf32>
    %c0_3 = arith.constant 0 : index
    %c0_4 = arith.constant 0 : index
    %c0_5 = arith.constant 0 : index
    %2 = vector.load %arg3[%c0_3, %c0_4, %c0_5] : memref<3x32x32xf32, #tpu.memory_space<vmem>>, vector<1x32x32xf32>
    %3 = vector.shape_cast %2 : vector<1x32x32xf32> to vector<32x32xf32>
    %cst = arith.constant dense<0.000000e+00> : vector<4x32xf32>
    %4 = tpu.matmul %0, %3, %cst {dimension_numbers = #tpu.dot_dimension_numbers<[1], [0], [0], [1], [0, 0, 1, 1], [], []>} : vector<4x32xf32>, vector<32x32xf32>, vector<4x32xf32> -> vector<4x32xf32>
    %5 = vector.extract_strided_slice %0 {offsets = [0, 0], sizes = [1, 32], strides = [1, 1]} : vector<4x32xf32> to vector<1x32xf32>
    %6 = vector.extract_strided_slice %0 {offsets = [1, 0], sizes = [1, 32], strides = [1, 1]} : vector<4x32xf32> to vector<1x32xf32>
    %7 = arith.mulf %5, %6 : vector<1x32xf32>
    %c1 = arith.constant 1 : index
    %c0_6 = arith.constant 0 : index
    %c0_7 = arith.constant 0 : index
    %8 = vector.load %arg3[%c1, %c0_6, %c0_7] : memref<3x32x32xf32, #tpu.memory_space<vmem>>, vector<1x32x32xf32>
    %9 = vector.shape_cast %8 : vector<1x32x32xf32> to vector<32x32xf32>
    %cst_8 = arith.constant dense<0.000000e+00> : vector<1x32xf32>
    %10 = tpu.matmul %7, %9, %cst_8 {dimension_numbers = #tpu.dot_dimension_numbers<[1], [0], [0], [1], [0, 0, 1, 1], [], []>} : vector<1x32xf32>, vector<32x32xf32>, vector<1x32xf32> -> vector<1x32xf32>
    %11 = tpu.iota {dimensions = array<i32: 0>} : vector<4x1xi32>
    %c0_i32 = arith.constant 0 : i32
    %12 = vector.broadcast %c0_i32 : i32 to vector<4x1xi32>
    %13 = arith.cmpi eq, %11, %12 : vector<4x1xi32>
    %cst_9 = arith.constant 0.000000e+00 : f32
    %14 = vector.shape_cast %13 : vector<4x1xi1> to vector<4x1xi1>
    %15 = vector.broadcast %14 : vector<4x1xi1> to vector<4x32xi1>
    %16 = vector.shape_cast %10 : vector<1x32xf32> to vector<1x32xf32>
    %17 = vector.broadcast %16 : vector<1x32xf32> to vector<4x32xf32>
    %18 = vector.broadcast %cst_9 : f32 to vector<4x32xf32>
    %19 = arith.select %15, %17, %18 : vector<4x32xi1>, vector<4x32xf32>
    %20 = arith.addf %4, %19 : vector<4x32xf32>
    %c0_10 = arith.constant 0 : index
    %c0_11 = arith.constant 0 : index
    %21 = vector.load %arg6[%c0_10, %c0_11] : memref<4x32xf32, #tpu.memory_space<vmem>>, vector<4x32xf32>
    tpu.vector_store %arg6[%c0_10, %c0_11], %20 {strides = array<i32>} : memref<4x32xf32, #tpu.memory_space<vmem>>, vector<4x32xf32>,
    %c0_12 = arith.constant 0 : index
    %c0_13 = arith.constant 0 : index
    %22 = vector.load %arg4[%c0_12, %c0_13] : memref<16x16xf32, #tpu.memory_space<vmem>>, vector<16x16xf32>
    %cst_14 = arith.constant dense<0.000000e+00> : vector<16x32xf32>
    %23 = tpu.matmul %22, %1, %cst_14 {dimension_numbers = #tpu.dot_dimension_numbers<[1], [0], [0], [1], [0, 0, 1, 1], [], []>} : vector<16x16xf32>, vector<16x32xf32>, vector<16x32xf32> -> vector<16x32xf32>
    %c2 = arith.constant 2 : index
    %c0_15 = arith.constant 0 : index
    %c0_16 = arith.constant 0 : index
    %24 = vector.load %arg3[%c2, %c0_15, %c0_16] : memref<3x32x32xf32, #tpu.memory_space<vmem>>, vector<1x32x32xf32>
    %25 = vector.shape_cast %24 : vector<1x32x32xf32> to vector<32x32xf32>
    %cst_17 = arith.constant dense<0.000000e+00> : vector<16x32xf32>
    %26 = tpu.matmul %1, %25, %cst_17 {dimension_numbers = #tpu.dot_dimension_numbers<[1], [0], [0], [1], [0, 0, 1, 1], [], []>} : vector<16x32xf32>, vector<32x32xf32>, vector<16x32xf32> -> vector<16x32xf32>
    %27 = arith.addf %23, %26 : vector<16x32xf32>
    %c0_18 = arith.constant 0 : index
    %c0_19 = arith.constant 0 : index
    %28 = vector.load %arg5[%c0_18, %c0_19] : memref<16x32xf32, #tpu.memory_space<vmem>>, vector<16x32xf32>
    %29 = arith.addf %27, %28 : vector<16x32xf32>
    %c0_20 = arith.constant 0 : index
    %c0_21 = arith.constant 0 : index
    %30 = vector.load %arg7[%c0_20, %c0_21] : memref<16x32xf32, #tpu.memory_space<vmem>>, vector<16x32xf32>
    tpu.vector_store %arg7[%c0_20, %c0_21], %29 {strides = array<i32>} : memref<16x32xf32, #tpu.memory_space<vmem>>, vector<16x32xf32>,
    return
  }
  func.func @transform_0(%arg0: i32) -> (i32, i32) {
    %c0_i32 = arith.constant 0 : i32
    %c0_i32_0 = arith.constant 0 : i32
    return %c0_i32, %arg0 : i32, i32
  }
  func.func @transform_1(%arg0: i32) -> (i32, i32) {
    %c0_i32 = arith.constant 0 : i32
    %c0_i32_0 = arith.constant 0 : i32
    return %c0_i32, %arg0 : i32, i32
  }
  func.func @transform_2(%arg0: i32) -> (i32, i32, i32) {
    %c0_i32 = arith.constant 0 : i32
    %c0_i32_0 = arith.constant 0 : i32
    %c0_i32_1 = arith.constant 0 : i32
    %c0_i32_2 = arith.constant 0 : i32
    return %c0_i32, %c0_i32_0, %c0_i32_1 : i32, i32, i32
  }
  func.func @transform_3(%arg0: i32) -> (i32, i32) {
    %c0_i32 = arith.constant 0 : i32
    %c0_i32_0 = arith.constant 0 : i32
    %c0_i32_1 = arith.constant 0 : i32
    return %c0_i32, %c0_i32_0 : i32, i32
  }
  func.func @transform_4(%arg0: i32) -> (i32, i32) {
    %c0_i32 = arith.constant 0 : i32
    %c0_i32_0 = arith.constant 0 : i32
    %c0_i32_1 = arith.constant 0 : i32
    return %c0_i32, %c0_i32_0 : i32, i32
  }
  func.func @transform_5(%arg0: i32) -> (i32, i32) {
    %c0_i32 = arith.constant 0 : i32
    %c0_i32_0 = arith.constant 0 : i32
    return %c0_i32, %arg0 : i32, i32
  }
  func.func @transform_6(%arg0: i32) -> (i32, i32) {
    %c0_i32 = arith.constant 0 : i32
    %c0_i32_0 = arith.constant 0 : i32
    return %c0_i32, %arg0 : i32, i32
  }
}

</mosaic_0001>

<llo_original>
// kernel: tpu_custom_call.1
$region0: #{tpu_custom_call.1}
  #allocation0 [shape = 'u32[]', space=smem, size = 0x4, offset = 0x4, fixed_abs, tag = 'smem constant byte address 0x4 - core index']
  #allocation1 [shape = 'u32[72,128]{1,0:T(1,128)}', space=vmem, size = 0x9000, scoped, tag = 'internal scratch']
  %s0 = inlined_call_operand.hbm [shape: f32[4,32], index: 0, kind: input, shape index: {}]
  %s1 = inlined_call_operand.hbm [shape: f32[16,32], index: 1, kind: input, shape index: {}]
  %s2 = inlined_call_operand.hbm [shape: f32[3,32,32], index: 2, kind: input, shape index: {}]
  %s3 = inlined_call_operand.hbm [shape: f32[16,16], index: 3, kind: input, shape index: {}]
  %s4 = inlined_call_operand.hbm [shape: f32[16,32], index: 4, kind: input, shape index: {}]
  %s5 = inlined_call_operand.hbm [shape: f32[4,32], index: 5, kind: output, shape index: {0}]
  %s6 = inlined_call_operand.hbm [shape: f32[16,32], index: 6, kind: output, shape index: {1}]
  %7 = xla_tuple %s5, %s6
  %s8 = sld [smem:[#allocation0]]
  $region58: #{tpu_custom_call.1} parent=0
    _
  %s10 = ssub.s32 1, %s8
  %s11 = scalar_select 0, %s10, %s8
  $region1: #{tpu_custom_call.1} parent=0
    #allocation2 [shape = 'u8[2048]{0}', space=vmem, size = 0x800, scoped, tag = 'input window, operand 0, single buffered']
    #allocation3 [shape = 's32[1]{0}', space=sflag, size = 0x4, scoped, tag = 'scoped memory for tpu_custom_call.1']
    #allocation4 [shape = 's32[1]{0}', space=sflag, size = 0x4, scoped, tag = 'scoped memory for tpu_custom_call.1']
    #allocation5 [shape = 'u8[8192]{0}', space=vmem, size = 0x2000, scoped, tag = 'input window, operand 1, single buffered']
    #allocation6 [shape = 's32[1]{0}', space=sflag, size = 0x4, scoped, tag = 'scoped memory for tpu_custom_call.1']
    #allocation7 [shape = 'u8[49152]{0}', space=vmem, size = 0xc000, scoped, tag = 'input window, operand 2, single buffered']
    #allocation8 [shape = 'u8[8192]{0}', space=vmem, size = 0x2000, scoped, tag = 'input window, operand 3, single buffered']
    #allocation9 [shape = 's32[1]{0}', space=sflag, size = 0x4, scoped, tag = 'scoped memory for tpu_custom_call.1']
    #allocation10 [shape = 'u8[8192]{0}', space=vmem, size = 0x2000, scoped, tag = 'input window, operand 4, single buffered']
    #allocation11 [shape = 'u8[2048]{0}', space=vmem, size = 0x800, scoped, tag = 'output window, operand 0, single buffered']
    #allocation12 [shape = 'u8[8192]{0}', space=vmem, size = 0x2000, scoped, tag = 'output window, operand 1, single buffered']
    #allocation13 [shape = 's32[1]{0}', space=sflag, size = 0x4, scoped, tag = 'scoped memory for tpu_custom_call.1']
    %12 = vsyncpa [#allocation3], 0
    %13 = vsyncpa [#allocation6], 0
    %14 = vsyncpa [#allocation9], 0
    %15 = vsyncpa [#allocation4], 0
    %16 = vsyncpa [#allocation13], 0
    // Predicated region
    $region2: #{tpu_custom_call.1} parent=1 // pred_check
      _
    $region3: #{tpu_custom_call.1} parent=1 // pred_check_branch
      %18 = sbr.rel (0) target = $region5
    $region4: #{tpu_custom_call.1} parent=1 // pred_region
      %20 = vsyncadd [#allocation3], 0
      %s22 = sshll.u32 %s0, 4
      %s23 = int_to_ptr.hbm [resolvable:$true] %s22
      %s24 = sshll.u32 [#allocation2], 4
      %s25 = int_to_ptr.vmem [resolvable:$true] %s24
      %27 = dma.hbm_to_vmem [thread:$0]  %s23, 64, %s25, [#allocation3]
    $region5: #{tpu_custom_call.1} parent=1 // pred_fallthru
      _
    // Predicated region
    $region6: #{tpu_custom_call.1} parent=1 // pred_check
      _
    $region7: #{tpu_custom_call.1} parent=1 // pred_check_branch
      %29 = sbr.rel (0) target = $region9
    $region8: #{tpu_custom_call.1} parent=1 // pred_region
      %31 = vsyncadd [#allocation6], 0
      %s32 = sshll.u32 %s1, 4
      %s33 = int_to_ptr.hbm [resolvable:$true] %s32
      %s34 = sshll.u32 [#allocation5], 4
      %s35 = int_to_ptr.vmem [resolvable:$true] %s34
      %40 = dma.hbm_to_vmem [thread:$0]  %s33, 256, %s35, [#allocation6], 128, 128, 8
    $region9: #{tpu_custom_call.1} parent=1 // pred_fallthru
      _
    // Predicated region
    $region10: #{tpu_custom_call.1} parent=1 // pred_check
      _
    $region11: #{tpu_custom_call.1} parent=1 // pred_check_branch
      %42 = sbr.rel (0) target = $region13
    $region12: #{tpu_custom_call.1} parent=1 // pred_region
      %44 = vsyncadd [#allocation6], 0
      %s45 = sshll.u32 %s2, 4
      %s46 = int_to_ptr.hbm [resolvable:$true] %s45
      %s47 = sshll.u32 [#allocation7], 4
      %s48 = int_to_ptr.vmem [resolvable:$true] %s47
      %53 = dma.hbm_to_vmem [thread:$0]  %s46, 1536, %s48, [#allocation6], 128, 128, 8
    $region13: #{tpu_custom_call.1} parent=1 // pred_fallthru
      _
    // Predicated region
    $region14: #{tpu_custom_call.1} parent=1 // pred_check
      _
    $region15: #{tpu_custom_call.1} parent=1 // pred_check_branch
      %55 = sbr.rel (0) target = $region17
    $region16: #{tpu_custom_call.1} parent=1 // pred_region
      %57 = vsyncadd [#allocation9], 0
      %s58 = sshll.u32 %s3, 4
      %s59 = int_to_ptr.hbm [resolvable:$true] %s58
      %s60 = sshll.u32 [#allocation8], 4
      %s61 = int_to_ptr.vmem [resolvable:$true] %s60
      %66 = dma.hbm_to_vmem [thread:$0]  %s59, 256, %s61, [#allocation9], 128, 128, 8
    $region17: #{tpu_custom_call.1} parent=1 // pred_fallthru
      _
    // Predicated region
    $region18: #{tpu_custom_call.1} parent=1 // pred_check
      _
    $region19: #{tpu_custom_call.1} parent=1 // pred_check_branch
      %68 = sbr.rel (0) target = $region21
    $region20: #{tpu_custom_call.1} parent=1 // pred_region
      %70 = vsyncadd [#allocation9], 0
      %s71 = sshll.u32 %s4, 4
      %s72 = int_to_ptr.hbm [resolvable:$true] %s71
      %s73 = sshll.u32 [#allocation10], 4
      %s74 = int_to_ptr.vmem [resolvable:$true] %s73
      %79 = dma.hbm_to_vmem [thread:$0]  %s72, 256, %s74, [#allocation9], 128, 128, 8
    $region21: #{tpu_custom_call.1} parent=1 // pred_fallthru
      _
    // Predicated region
    $region22: #{tpu_custom_call.1} parent=1 // pred_check
      _
    $region23: #{tpu_custom_call.1} parent=1 // pred_check_branch
      %81 = sbr.rel (0) target = $region25
    $region24: #{tpu_custom_call.1} parent=1 // pred_region
      %83 = dma.done [#allocation3], 64
    $region25: #{tpu_custom_call.1} parent=1 // pred_fallthru
      _
    // Predicated region
    $region26: #{tpu_custom_call.1} parent=1 // pred_check
      _
    $region27: #{tpu_custom_call.1} parent=1 // pred_check_branch
      %85 = sbr.rel (0) target = $region29
    $region28: #{tpu_custom_call.1} parent=1 // pred_region
      %87 = dma.done [#allocation6], 256
    $region29: #{tpu_custom_call.1} parent=1 // pred_fallthru
      _
    // Predicated region
    $region30: #{tpu_custom_call.1} parent=1 // pred_check
      _
    $region31: #{tpu_custom_call.1} parent=1 // pred_check_branch
      %89 = sbr.rel (0) target = $region33
    $region32: #{tpu_custom_call.1} parent=1 // pred_region
      %91 = dma.done [#allocation6], 1536
    $region33: #{tpu_custom_call.1} parent=1 // pred_fallthru
      _
    // Predicated region
    $region34: #{tpu_custom_call.1} parent=1 // pred_check
      _
    $region35: #{tpu_custom_call.1} parent=1 // pred_check_branch
      %93 = sbr.rel (0) target = $region37
    $region36: #{tpu_custom_call.1} parent=1 // pred_region
      %95 = dma.done [#allocation9], 256
    $region37: #{tpu_custom_call.1} parent=1 // pred_fallthru
      _
    // Predicated region
    $region38: #{tpu_custom_call.1} parent=1 // pred_check
      _
    $region39: #{tpu_custom_call.1} parent=1 // pred_check_branch
      %97 = sbr.rel (0) target = $region41
    $region40: #{tpu_custom_call.1} parent=1 // pred_region
      %99 = dma.done [#allocation9], 256
    $region41: #{tpu_custom_call.1} parent=1 // pred_fallthru
      _
    %v100 = vld [vmem:[#allocation2] sm:$0xf]
    %v101 = vld [vmem:[#allocation5] sm:$0xff]
    %v102 = vld [vmem:[#allocation5 + $0x8] sm:$0xff]
    %v103 = vld [vmem:[#allocation7] sm:$0xff]
    %v104 = vld [vmem:[#allocation7 + $0x8] sm:$0xff]
    %v105 = vld [vmem:[#allocation7 + $0x10] sm:$0xff]
    %v106 = vld [vmem:[#allocation7 + $0x18] sm:$0xff]
    %v108 = vrot.slane %v100, 1
    %v110 = vmul.f32 %v100, %v108
    %s111 = scalar_lea.vmem [#allocation7], 32
    %v112 = vld [vmem:[%s111] sm:$0xff]
    %v113 = vld [vmem:[%s111 + $0x8] sm:$0xff]
    %v114 = vld [vmem:[%s111 + $0x10] sm:$0xff]
    %v115 = vld [vmem:[%s111 + $0x18] sm:$0xff]
    %vm116 = vcmask 261120
    %v118 = vsel %vm116, %v110, 0
    %120 = vmatpush.msra.mxu0 0.0
    %121 = vmatpush.msra.mxu0 0.0
    %122 = vmatpush.msra.mxu0 0.0
    %123 = vmatpush.msra.mxu0 0.0
    %124 = vmatpush.msra.mxu0 0.0
    %125 = vmatpush.msra.mxu0 0.0
    %126 = vmatpush.msra.mxu0 0.0
    %127 = vmatpush.msra.mxu0 0.0
    %128 = vmatpush.msra.mxu0 0.0
    %129 = vmatpush.msra.mxu0 0.0
    %130 = vmatpush.msra.mxu0 0.0
    %131 = vmatpush.msra.mxu0 0.0
    %132 = vmatpush.msra.mxu0 %v115
    %133 = vmatpush.msra.mxu0 %v114
    %134 = vmatpush.msra.mxu0 %v113
    %135 = vmatpush.msra.mxu0 %v112
    %136 = vmatmul.f32.gmra.mxu0 %v118
    %v137 = vpop.f32.mrf.mxu0
    %v138 = vadd.f32 0.0, %v137
    %139 = vdwg.mxu0
    %v140 = vlaneseq
    %v141 = vshrl.u32 %v140, 7
    %vm142 = vcmp.eq.s32.totalorder %v141, 0
    %v143 = vsel %vm142, 1, 0
    %vm144 = vcmp.eq.s32.totalorder %v143, 1
    %v145 = vperm.slane %v138, 0
    %v146 = vsel %vm144, %v145, 0.0
    %v147 = vsel %vm116, %v100, 0
    %149 = vmatpush.msra.mxu0 0.0
    %150 = vmatpush.msra.mxu0 0.0
    %151 = vmatpush.msra.mxu0 0.0
    %152 = vmatpush.msra.mxu0 0.0
    %153 = vmatpush.msra.mxu0 0.0
    %154 = vmatpush.msra.mxu0 0.0
    %155 = vmatpush.msra.mxu0 0.0
    %156 = vmatpush.msra.mxu0 0.0
    %157 = vmatpush.msra.mxu0 0.0
    %158 = vmatpush.msra.mxu0 0.0
    %159 = vmatpush.msra.mxu0 0.0
    %160 = vmatpush.msra.mxu0 0.0
    %161 = vmatpush.msra.mxu0 %v106
    %162 = vmatpush.msra.mxu0 %v105
    %163 = vmatpush.msra.mxu0 %v104
    %164 = vmatpush.msra.mxu0 %v103
    %165 = vmatmul.f32.gmra.mxu0 %v147
    %v166 = vpop.f32.mrf.mxu0
    %v167 = vadd.f32 %v146, %v166
    %168 = vdwg.mxu0
    %vm169 = vcmask 257024
    %170 = vst.msk [vmem:[#allocation11] sm:$0xf] %vm169, %v167
    %v171 = vld [vmem:[#allocation8] sm:$0xff]
    %v172 = vld [vmem:[#allocation8 + $0x8] sm:$0xff]
    %s173 = scalar_lea.vmem [#allocation7], 64
    %v174 = vld [vmem:[%s173] sm:$0xff]
    %v175 = vld [vmem:[%s173 + $0x8] sm:$0xff]
    %v176 = vld [vmem:[%s173 + $0x10] sm:$0xff]
    %v177 = vld [vmem:[%s173 + $0x18] sm:$0xff]
    %v179 = vsel %vm116, %v101, 0
    %v182 = vsel %vm116, %v102, 0
    %184 = vmatpush.msra.mxu0 0.0
    %185 = vmatpush.msra.mxu0 0.0
    %186 = vmatpush.msra.mxu0 0.0
    %187 = vmatpush.msra.mxu0 0.0
    %188 = vmatpush.msra.mxu0 0.0
    %189 = vmatpush.msra.mxu0 0.0
    %190 = vmatpush.msra.mxu0 0.0
    %191 = vmatpush.msra.mxu0 0.0
    %192 = vmatpush.msra.mxu0 0.0
    %193 = vmatpush.msra.mxu0 0.0
    %194 = vmatpush.msra.mxu0 0.0
    %195 = vmatpush.msra.mxu0 0.0
    %196 = vmatpush.msra.mxu0 %v177
    %197 = vmatpush.msra.mxu0 %v176
    %198 = vmatpush.msra.mxu0 %v175
    %199 = vmatpush.msra.mxu0 %v174
    %200 = vmatmul.f32.gmra.mxu0 %v179
    %v201 = vpop.f32.mrf.mxu0
    %v202 = vadd.f32 0.0, %v201
    %203 = vmatmul.f32.gmra.mxu0 %v182
    %v204 = vpop.f32.mrf.mxu0
    %v205 = vadd.f32 0.0, %v204
    %206 = vdwg.mxu0
    %vm207 = vcmask 130048
    %v209 = vsel %vm207, %v171, 0
    %v212 = vsel %vm207, %v172, 0
    %214 = vmatpush.msra.mxu0 0.0
    %215 = vmatpush.msra.mxu0 0.0
    %216 = vmatpush.msra.mxu0 0.0
    %217 = vmatpush.msra.mxu0 0.0
    %218 = vmatpush.msra.mxu0 0.0
    %219 = vmatpush.msra.mxu0 0.0
    %220 = vmatpush.msra.mxu0 0.0
    %221 = vmatpush.msra.mxu0 0.0
    %222 = vmatpush.msra.mxu0 0.0
    %223 = vmatpush.msra.mxu0 0.0
    %224 = vmatpush.msra.mxu0 0.0
    %225 = vmatpush.msra.mxu0 0.0
    %226 = vmatpush.msra.mxu0 0.0
    %227 = vmatpush.msra.mxu0 0.0
    %228 = vmatpush.msra.mxu0 %v102
    %229 = vmatpush.msra.mxu0 %v101
    %230 = vmatmul.f32.gmra.mxu0 %v209
    %v231 = vpop.f32.mrf.mxu0
    %v232 = vadd.f32 %v202, %v231
    %233 = vmatmul.f32.gmra.mxu0 %v212
    %v234 = vpop.f32.mrf.mxu0
    %v235 = vadd.f32 %v205, %v234
    %236 = vdwg.mxu0
    %v237 = vld [vmem:[#allocation10] sm:$0xff]
    %v238 = vld [vmem:[#allocation10 + $0x8] sm:$0xff]
    %v239 = vadd.f32 %v232, %v237
    %v240 = vadd.f32 %v235, %v238
    %241 = vst.msk [vmem:[#allocation12] sm:$0xff] %vm116, %v239
    %242 = vst.msk [vmem:[#allocation12 + $0x8] sm:$0xff] %vm116, %v240
    // Predicated region
    $region42: #{tpu_custom_call.1} parent=1 // pred_check
      _
    $region43: #{tpu_custom_call.1} parent=1 // pred_check_branch
      %244 = sbr.rel (0) target = $region45
    $region44: #{tpu_custom_call.1} parent=1 // pred_region
      %246 = vsyncadd [#allocation4], 0
      %s248 = sshll.u32 [#allocation11], 4
      %s249 = int_to_ptr.vmem [resolvable:$true] %s248
      %s250 = sshll.u32 %s5, 4
      %s251 = int_to_ptr.hbm [resolvable:$true] %s250
      %253 = dma.vmem_to_hbm [thread:$0]  %s249, 64, %s251, [#allocation4]
    $region45: #{tpu_custom_call.1} parent=1 // pred_fallthru
      _
    // Predicated region
    $region46: #{tpu_custom_call.1} parent=1 // pred_check
      _
    $region47: #{tpu_custom_call.1} parent=1 // pred_check_branch
      %255 = sbr.rel (0) target = $region49
    $region48: #{tpu_custom_call.1} parent=1 // pred_region
      %257 = vsyncadd [#allocation13], 0
      %s258 = sshll.u32 [#allocation12], 4
      %s259 = int_to_ptr.vmem [resolvable:$true] %s258
      %s260 = sshll.u32 %s6, 4
      %s261 = int_to_ptr.hbm [resolvable:$true] %s260
      %266 = dma.vmem_to_hbm [thread:$0]  %s259, 256, %s261, [#allocation13], 128, 128, 8
    $region49: #{tpu_custom_call.1} parent=1 // pred_fallthru
      _
    // Predicated region
    $region50: #{tpu_custom_call.1} parent=1 // pred_check
      _
    $region51: #{tpu_custom_call.1} parent=1 // pred_check_branch
      %268 = sbr.rel (0) target = $region53
    $region52: #{tpu_custom_call.1} parent=1 // pred_region
      %270 = dma.done [#allocation4], 64
    $region53: #{tpu_custom_call.1} parent=1 // pred_fallthru
      _
    // Predicated region
    $region54: #{tpu_custom_call.1} parent=1 // pred_check
      _
    $region55: #{tpu_custom_call.1} parent=1 // pred_check_branch
      %272 = sbr.rel (0) target = $region57
    $region56: #{tpu_custom_call.1} parent=1 // pred_region
      %274 = dma.done [#allocation13], 256
    $region57: #{tpu_custom_call.1} parent=1 // pred_fallthru
      _
    %275 = vsyncpa [#allocation3], 1
    %276 = vsyncpa [#allocation6], 1
    %277 = vsyncpa [#allocation9], 1
    %278 = vsyncpa [#allocation4], 1
    %279 = vsyncpa [#allocation13], 1

</llo_original>
